<compile_context>
chip_gen: v7x
topology: tpu7x:2x2x1
jax: 0.10.0
libtpu: 0.0.40
codegen_flags: <defaults>
</compile_context>

<pallas_src>
import jax
import jax.numpy as jnp
from jax import lax
from jax.experimental import pallas as pl
from jax.experimental.pallas import tpu as pltpu


def filter_sparse_kernel(tiles_ref, gram_ref, out_ref, arfa_ref, res_ref):
    # tiles_ref: (G,) i32 SMEM (scalar prefetch)  sorted vocab-tile index per step
    # gram_ref:  (G,) i32 SMEM (scalar prefetch)  original grammar token ids
    # out_ref:   (B, TV)  original decoder-output tile (HBM-aliased with res)
    # arfa_ref:  (B, 1)   f32, precomputed sigmoid gate, resident across the grid
    # res_ref:   (B, TV)  filtered output tile
    TV = res_ref.shape[-1]
    G = gram_ref.shape[0]

    tile = tiles_ref[pl.program_id(0)]                       # this step's vocab tile
    col = tile * TV + lax.broadcasted_iota(jnp.int32, (1, TV), 1)

    # Boolean union mask over the (small, static) grammar id list.  Duplicate ids
    # and out-of-range ids are harmless (OR is idempotent / never matches).
    mask = col == gram_ref[0]
    for k in range(1, G):                                    # G is small & static
        mask = jnp.logical_or(mask, col == gram_ref[k])

    x = out_ref[...].astype(jnp.float32)
    res_ref[...] = jnp.where(mask, x * arfa_ref[...], x).astype(res_ref.dtype)


def filter_forward(output, state, grammar, w, b, *, tile_v=512):
    """output: (B, 1, V), state: (1, B, H), grammar: (G,) i32,
       w: (1, H), b: (1,)  ->  (B, 1, V) with output's dtype.

    Donate `output` (jax.jit donate_argnums) to make the pass-through columns
    truly zero-copy; otherwise XLA inserts one plain copy for the alias."""
    B, T, V = output.shape
    L, Bs, H = state.shape
    assert T == 1 and L == 1 and B == Bs

    out2d = output.reshape(B, V)

    # arfa = sigmoid(state @ W^T + b)  -> (B, 1), computed once in the wrapper.
    state2d = jnp.transpose(state, (1, 0, 2)).reshape(B, H).astype(jnp.float32)
    w_col = w.reshape(H, 1).astype(jnp.float32)
    arfa = jax.nn.sigmoid(state2d @ w_col + b.astype(jnp.float32).reshape(1, 1))

    gram = grammar.reshape(-1).astype(jnp.int32)
    G = gram.shape[0]

    # Lane-dense tile width (multiple of 128, or the full vocab if it is small).
    TV = V if V <= tile_v else tile_v
    # Sorted tile index per grammar id; clamp only for safe addressing
    # (the kernel mask still uses the original ids, so clamped steps are no-ops).
    tiles = jnp.sort(jnp.clip(gram, 0, V - 1) // TV).astype(jnp.int32)

    itemsize = jnp.dtype(out2d.dtype).itemsize
    cost = pl.CostEstimate(
        flops=2 * B * TV * G,
        transcendentals=0,
        bytes_accessed=2 * B * TV * G * itemsize + (2 * G + B) * 4,
    )

    res = pl.pallas_call(
        filter_sparse_kernel,
        out_shape=jax.ShapeDtypeStruct((B, V), out2d.dtype),
        grid_spec=pltpu.PrefetchScalarGridSpec(
            num_scalar_prefetch=2,                       # tiles, gram -> SMEM
            grid=(G,),
            in_specs=[
                # data-dependent vocab tile; duplicates are consecutive (sorted)
                pl.BlockSpec((B, TV), lambda i, t_ref, g_ref: (0, t_ref[i])),
                # arfa gate: constant index_map -> resident in VMEM
                pl.BlockSpec((B, 1), lambda i, t_ref, g_ref: (0, 0)),
            ],
            out_specs=pl.BlockSpec((B, TV), lambda i, t_ref, g_ref: (0, t_ref[i])),
        ),
        # operand index counts the scalar-prefetch args: tiles=0, gram=1, out2d=2
        input_output_aliases={2: 0},
        compiler_params=pltpu.CompilerParams(
            dimension_semantics=("arbitrary",),          # sequential: residency of
        ),                                               # duplicate tiles required
        cost_estimate=cost,
    )(tiles, gram, out2d, arfa)
    return res.reshape(B, T, V)


def ref_forward(output, state, grammar, w, b):
    """Pure-JAX mirror of the PyTorch forward, for validation."""
    st = jnp.transpose(state, (1, 0, 2))                             # (B, 1, H)
    arfa = jax.nn.sigmoid(jnp.einsum("bth,oh->bto", st, w) + b)      # (B, 1, 1)
    V = output.shape[-1]
    memory = jnp.zeros((V,), jnp.float32).at[grammar].set(1.0)
    memory = jnp.broadcast_to(memory[None, None, :], (output.shape[0], 1, V))
    generic = 1.0 - memory
    return arfa * (output * memory) + output * generic


if __name__ == "__main__":
    B, H, V, G = 2, 32, 2048, 8  # batch, dec_hidden_size, vocab, #grammar ids
    TV = 512                     # vocab tile width -> ids span 4 distinct tiles

    key = jax.random.PRNGKey(0)
    k_out, k_state, k_w, k_b = jax.random.split(key, 4)

    output = jax.random.normal(k_out, (B, 1, V), dtype=jnp.float32)
    state = jax.random.normal(k_state, (1, B, H), dtype=jnp.float32)
    # ids spread across several tiles, with a duplicate to check idempotent masking
    grammar = jnp.array([3, 511, 700, 1023, 1024, 1500, 2047, 3], dtype=jnp.int32)

    # Deterministic Linear(H, 1) params (uniform(-1/sqrt(H), 1/sqrt(H)) like torch).
    bound = 1.0 / (H ** 0.5)
    w = jax.random.uniform(k_w, (1, H), jnp.float32, -bound, bound)
    b = jax.random.uniform(k_b, (1,), jnp.float32, -bound, bound)

    out_pallas = jax.block_until_ready(filter_forward(output, state, grammar, w, b, tile_v=TV))
    out_ref = jax.block_until_ready(ref_forward(output, state, grammar, w, b))

    assert out_pallas.shape == (B, 1, V)
    assert jnp.allclose(out_pallas, out_ref, atol=1e-5, rtol=1e-5)
    print("KERNEL_OK")
</pallas_src>

<mosaic_0001>
module attributes {stable_mosaic.version = 11 : i64} {
  func.func @filter_sparse_kernel(%arg0: i32, %arg1: memref<8xi32, #tpu.memory_space<smem>>, %arg2: memref<8xi32, #tpu.memory_space<smem>>, %arg3: memref<2x512xf32, #tpu.memory_space<vmem>>, %arg4: memref<2x1xf32, #tpu.memory_space<vmem>>, %arg5: memref<2x512xf32, #tpu.memory_space<vmem>>) attributes {dimension_semantics = [#tpu.dimension_semantics<arbitrary>], iteration_bounds = array<i64: 8>, scalar_prefetch = 2 : i64, scratch_operands = 0 : i64, tpu.core_type = #tpu.core_type<tc>, window_params = [{transform_indices = @transform_0, window_bounds = array<i64: 2, 512>}, {pipeline_mode = #tpu.pipeline_mode<synchronous>, transform_indices = @transform_1, window_bounds = array<i64: 2, 1>}, {transform_indices = @transform_2, window_bounds = array<i64: 2, 512>}]} {
    %0 = arith.index_cast %arg0 : i32 to index
    %1 = memref.load %arg1[%0] : memref<8xi32, #tpu.memory_space<smem>>
    %c512_i32 = arith.constant 512 : i32
    %2 = arith.muli %1, %c512_i32 : i32
    %3 = tpu.iota {dimensions = array<i32: 1>} : vector<1x512xi32>
    %4 = vector.broadcast %2 : i32 to vector<1x512xi32>
    %5 = arith.addi %4, %3 : vector<1x512xi32>
    %c0 = arith.constant 0 : index
    %6 = memref.load %arg2[%c0] : memref<8xi32, #tpu.memory_space<smem>>
    %7 = vector.broadcast %6 : i32 to vector<1x512xi32>
    %8 = arith.cmpi eq, %5, %7 : vector<1x512xi32>
    %c1 = arith.constant 1 : index
    %9 = memref.load %arg2[%c1] : memref<8xi32, #tpu.memory_space<smem>>
    %10 = vector.broadcast %9 : i32 to vector<1x512xi32>
    %11 = arith.cmpi eq, %5, %10 : vector<1x512xi32>
    %12 = arith.ori %8, %11 : vector<1x512xi1>
    %c2 = arith.constant 2 : index
    %13 = memref.load %arg2[%c2] : memref<8xi32, #tpu.memory_space<smem>>
    %14 = vector.broadcast %13 : i32 to vector<1x512xi32>
    %15 = arith.cmpi eq, %5, %14 : vector<1x512xi32>
    %16 = arith.ori %12, %15 : vector<1x512xi1>
    %c3 = arith.constant 3 : index
    %17 = memref.load %arg2[%c3] : memref<8xi32, #tpu.memory_space<smem>>
    %18 = vector.broadcast %17 : i32 to vector<1x512xi32>
    %19 = arith.cmpi eq, %5, %18 : vector<1x512xi32>
    %20 = arith.ori %16, %19 : vector<1x512xi1>
    %c4 = arith.constant 4 : index
    %21 = memref.load %arg2[%c4] : memref<8xi32, #tpu.memory_space<smem>>
    %22 = vector.broadcast %21 : i32 to vector<1x512xi32>
    %23 = arith.cmpi eq, %5, %22 : vector<1x512xi32>
    %24 = arith.ori %20, %23 : vector<1x512xi1>
    %c5 = arith.constant 5 : index
    %25 = memref.load %arg2[%c5] : memref<8xi32, #tpu.memory_space<smem>>
    %26 = vector.broadcast %25 : i32 to vector<1x512xi32>
    %27 = arith.cmpi eq, %5, %26 : vector<1x512xi32>
    %28 = arith.ori %24, %27 : vector<1x512xi1>
    %c6 = arith.constant 6 : index
    %29 = memref.load %arg2[%c6] : memref<8xi32, #tpu.memory_space<smem>>
    %30 = vector.broadcast %29 : i32 to vector<1x512xi32>
    %31 = arith.cmpi eq, %5, %30 : vector<1x512xi32>
    %32 = arith.ori %28, %31 : vector<1x512xi1>
    %c7 = arith.constant 7 : index
    %33 = memref.load %arg2[%c7] : memref<8xi32, #tpu.memory_space<smem>>
    %34 = vector.broadcast %33 : i32 to vector<1x512xi32>
    %35 = arith.cmpi eq, %5, %34 : vector<1x512xi32>
    %36 = arith.ori %32, %35 : vector<1x512xi1>
    %c0_0 = arith.constant 0 : index
    %c0_1 = arith.constant 0 : index
    %37 = vector.load %arg3[%c0_0, %c0_1] : memref<2x512xf32, #tpu.memory_space<vmem>>, vector<2x512xf32>
    %c0_2 = arith.constant 0 : index
    %c0_3 = arith.constant 0 : index
    %38 = vector.load %arg4[%c0_2, %c0_3] : memref<2x1xf32, #tpu.memory_space<vmem>>, vector<2x1xf32>
    %39 = vector.broadcast %38 : vector<2x1xf32> to vector<2x512xf32>
    %40 = arith.mulf %37, %39 : vector<2x512xf32>
    %41 = vector.shape_cast %36 : vector<1x512xi1> to vector<1x512xi1>
    %42 = vector.broadcast %41 : vector<1x512xi1> to vector<2x512xi1>
    %43 = arith.select %42, %40, %37 : vector<2x512xi1>, vector<2x512xf32>
    %c0_4 = arith.constant 0 : index
    %c0_5 = arith.constant 0 : index
    %44 = vector.load %arg5[%c0_4, %c0_5] : memref<2x512xf32, #tpu.memory_space<vmem>>, vector<2x512xf32>
    tpu.vector_store %arg5[%c0_4, %c0_5], %43 {strides = array<i32>} : memref<2x512xf32, #tpu.memory_space<vmem>>, vector<2x512xf32>,
    return
  }
  func.func @transform_0(%arg0: i32, %arg1: memref<8xi32, #tpu.memory_space<smem>>, %arg2: memref<8xi32, #tpu.memory_space<smem>>) -> (i32, i32) {
    %0 = arith.index_cast %arg0 : i32 to index
    %1 = memref.load %arg1[%0] : memref<8xi32, #tpu.memory_space<smem>>
    %c0_i32 = arith.constant 0 : i32
    %c0_i32_0 = arith.constant 0 : i32
    return %c0_i32, %1 : i32, i32
  }
  func.func @transform_1(%arg0: i32, %arg1: memref<8xi32, #tpu.memory_space<smem>>, %arg2: memref<8xi32, #tpu.memory_space<smem>>) -> (i32, i32) {
    %c0_i32 = arith.constant 0 : i32
    %c0_i32_0 = arith.constant 0 : i32
    %c0_i32_1 = arith.constant 0 : i32
    return %c0_i32, %c0_i32_0 : i32, i32
  }
  func.func @transform_2(%arg0: i32, %arg1: memref<8xi32, #tpu.memory_space<smem>>, %arg2: memref<8xi32, #tpu.memory_space<smem>>) -> (i32, i32) {
    %0 = arith.index_cast %arg0 : i32 to index
    %1 = memref.load %arg1[%0] : memref<8xi32, #tpu.memory_space<smem>>
    %c0_i32 = arith.constant 0 : i32
    %c0_i32_0 = arith.constant 0 : i32
    return %c0_i32, %1 : i32, i32
  }
}

</mosaic_0001>

<llo_original>
// kernel: tpu_custom_call.1
$region0: #{tpu_custom_call.1}
  #allocation0 [shape = 'u32[]', space=smem, size = 0x4, offset = 0x4, fixed_abs, tag = 'smem constant byte address 0x4 - core index']
  #allocation1 [shape = 'u32[144,128]{1,0:T(1,128)}', space=vmem, size = 0x12000, scoped, tag = 'internal scratch']
  #allocation2 [shape = 's32[1]{0}', space=sflag, size = 0x4, scoped, tag = 'scoped memory for tpu_custom_call.1']
  #allocation3 [shape = 'u8[512]{0}', space=smem, size = 0x200, scoped, tag = 'prefetched SMEM operand 0']
  #allocation4 [shape = 'u8[512]{0}', space=smem, size = 0x200, scoped, tag = 'prefetched SMEM operand 1']
  %s0 = inlined_call_operand.vmem [shape: s32[8], index: 0, kind: input, shape index: {}]
  %s1 = inlined_call_operand.vmem [shape: s32[8], index: 1, kind: input, shape index: {}]
  %s2 = inlined_call_operand.hbm [shape: f32[2,2048], index: 2, kind: input, shape index: {}, may-alias: {2,4}]
  %s3 = inlined_call_operand.vmem [shape: f32[2,1], index: 3, kind: input, shape index: {}]
  %s4 = inlined_call_operand.hbm [shape: f32[2,2048], index: 4, kind: output, shape index: {}, may-alias: {2,4}]
  %s5 = sld [smem:[#allocation0]]
  $region45: #{tpu_custom_call.1} parent=0
    _
  %s7 = ssub.s32 1, %s5
  %s8 = scalar_select 0, %s7, %s5
  %s9 = sshll.u32 %s0, 4
  %s10 = int_to_ptr.vmem [resolvable:$true] %s9
  %12 = dma.vmem_to_smem %s10, 16, [#allocation3], [#allocation2]
  %s13 = sshll.u32 %s1, 4
  %s14 = int_to_ptr.vmem [resolvable:$true] %s13
  %16 = dma.vmem_to_smem %s14, 16, [#allocation4], [#allocation2]
  %17 = dma.done [#allocation2], 32
  %18 = sfence
  $region1: #{tpu_custom_call.1} parent=0
    #allocation5 [shape = 'u8[8192]{0}', space=vmem, size = 0x2000, scoped, tag = 'input window, operand 2']
    #allocation6 [shape = 's32[2]{0}', space=sflag, size = 0x8, scoped, tag = 'scoped memory for tpu_custom_call.1']
    #allocation7 [shape = 's32[2]{0}', space=sflag, size = 0x8, scoped, tag = 'scoped memory for tpu_custom_call.1']
    #allocation8 [shape = 'u8[8192]{0}', space=vmem, size = 0x2000, scoped, tag = 'output window, operand 0']
    %19 = vsyncpa [#allocation6], 0
    %s20 = scalar_lea.sflag [#allocation6], 1
    %21 = vsyncpa %s20, 0
    %22 = vsyncpa [#allocation7], 0
    %s23 = scalar_lea.sflag [#allocation7], 1
    %24 = vsyncpa %s23, 0
    loop: start=0, step=1, limit=10
    $region2: #{tpu_custom_call.1} parent=1 // loop_pre_header
      _
    $region3: #{tpu_custom_call.1} parent=1 // loop_header
      %s26 = sphi 0, %s30
      %p27 = scmp.ge.s32.totalorder %s26, 10
      %s38 = sphi 0, %s40
      %s41 = sphi 0, %s38
      %s42 = sphi 0, %s41
      %s58 = sphi 0, %s42
      %s62 = sphi 0, %s62
      %s64 = sphi 0, %s62
      %s65 = sphi 0, %s64
      %s79 = sphi 0, %s65
      %s87 = sphi 0, %s89
      %s90 = sphi 0, %s87
      %s91 = sphi 0, %s90
      %s107 = sphi 0, %s91
    $region4: #{tpu_custom_call.1} parent=1 // loop_header_branch
      %29 = sbr.rel (%p27) target = $region8
    $region5: #{tpu_custom_call.1} parent=1 // loop_body
      %s31 = ssub.s32 %s26, 1
      %s32 = ssub.s32 %s26, 2
      %s33 = sadd.s32 %s26, 1
      %s34 = sld [smem:[#allocation3 + %s26]]
      %s35 = sld [smem:[#allocation3 + %s33]]
      %s36 = ssub.s32 %s34, %s35
      %p37 = scmp.eq.s32.totalorder %s36, 0
      %s39 = sadd.s32 %s38, 1
      %s40 = scalar_select %p37, %s38, %s39
      %p43 = pneg %p37
      %p44 = scmp.eq.s32.totalorder %s26, 7
      %p45 = por %p43, %p44
      %p46 = scmp.ne.s32.totalorder %s38, %s41
      %p47 = scmp.eq.s32.totalorder %s26, 0
      %p48 = por %p46, %p47
      %p49 = scmp.ne.s32.totalorder %s38, %s41
      %p50 = scmp.eq.s32.totalorder %s31, 7
      %p51 = por %p49, %p50
      %p52 = scmp.ne.s32.totalorder %s41, %s42
      %p53 = scmp.eq.s32.totalorder %s31, 0
      %p54 = por %p52, %p53
      %p55 = scmp.ne.s32.totalorder %s41, %s42
      %p56 = scmp.eq.s32.totalorder %s32, 7
      %p57 = por %p55, %p56
      %p59 = scmp.ne.s32.totalorder %s42, %s58
      %p60 = scmp.eq.s32.totalorder %s32, 0
      %p61 = por %p59, %p60
      %s63 = sadd.s32 %s62, 1
      %p66 = scmp.eq.s32.totalorder %s26, 7
      %p67 = scmp.ne.s32.totalorder %s62, %s64
      %p68 = scmp.eq.s32.totalorder %s26, 0
      %p69 = por %p67, %p68
      %p70 = scmp.ne.s32.totalorder %s62, %s64
      %p71 = scmp.eq.s32.totalorder %s31, 7
      %p72 = por %p70, %p71
      %p73 = scmp.ne.s32.totalorder %s64, %s65
      %p74 = scmp.eq.s32.totalorder %s31, 0
      %p75 = por %p73, %p74
      %p76 = scmp.ne.s32.totalorder %s64, %s65
      %p77 = scmp.eq.s32.totalorder %s32, 7
      %p78 = por %p76, %p77
      %p80 = scmp.ne.s32.totalorder %s65, %s79
      %p81 = scmp.eq.s32.totalorder %s32, 0
      %p82 = por %p80, %p81
      %s83 = sld [smem:[#allocation3 + %s26]]
      %s84 = sld [smem:[#allocation3 + %s33]]
      %s85 = ssub.s32 %s83, %s84
      %p86 = scmp.eq.s32.totalorder %s85, 0
      %s88 = sadd.s32 %s87, 1
      %s89 = scalar_select %p86, %s87, %s88
      %p92 = pneg %p86
      %p93 = scmp.eq.s32.totalorder %s26, 7
      %p94 = por %p92, %p93
      %p95 = scmp.ne.s32.totalorder %s87, %s90
      %p96 = scmp.eq.s32.totalorder %s26, 0
      %p97 = por %p95, %p96
      %p98 = scmp.ne.s32.totalorder %s87, %s90
      %p99 = scmp.eq.s32.totalorder %s31, 7
      %p100 = por %p98, %p99
      %p101 = scmp.ne.s32.totalorder %s90, %s91
      %p102 = scmp.eq.s32.totalorder %s31, 0
      %p103 = por %p101, %p102
      %p104 = scmp.ne.s32.totalorder %s90, %s91
      %p105 = scmp.eq.s32.totalorder %s32, 7
      %p106 = por %p104, %p105
      %p108 = scmp.ne.s32.totalorder %s91, %s107
      %p109 = scmp.eq.s32.totalorder %s32, 0
      %p110 = por %p108, %p109
      %p111 = scmp.le.s32.totalorder 1, %s26
      %p112 = scmp.lt.s32.totalorder %s26, 9
      %p113 = pnand %p111, %p112
      %p114 = pneg %p113
      // Predicated region
      $region9: #{tpu_custom_call.1} parent=5 // pred_check
        _
      $region10: #{tpu_custom_call.1} parent=5 // pred_check_branch
        %116 = sbr.rel (%p113) target = $region12
      $region11: #{tpu_custom_call.1} parent=5 // pred_region
        %s117 = ssub.s32 %s26, 1
        // Predicated region
        $region13: #{tpu_custom_call.1} parent=11 // pred_check
          %p118 = pneg %p75
        $region14: #{tpu_custom_call.1} parent=11 // pred_check_branch
          %120 = sbr.rel (%p118) target = $region16
        $region15: #{tpu_custom_call.1} parent=11 // pred_region
          _
        $region16: #{tpu_custom_call.1} parent=11 // pred_fallthru
          _
      $region12: #{tpu_custom_call.1} parent=5 // pred_fallthru
        _
      %p121 = scmp.lt.s32.totalorder %s26, 8
      // Predicated region
      $region17: #{tpu_custom_call.1} parent=5 // pred_check
        %p122 = pneg %p121
      $region18: #{tpu_custom_call.1} parent=5 // pred_check_branch
        %124 = sbr.rel (%p122) target = $region20
      $region19: #{tpu_custom_call.1} parent=5 // pred_region
        // Predicated region
        $region21: #{tpu_custom_call.1} parent=19 // pred_check
          %p125 = pneg %p48
        $region22: #{tpu_custom_call.1} parent=19 // pred_check_branch
          %127 = sbr.rel (%p125) target = $region24
        $region23: #{tpu_custom_call.1} parent=19 // pred_region
          %s128 = sand.u32 %s38, 1
          %s129 = scalar_lea.sflag [#allocation6], %s128
          %s130 = sand.u32 %s38, 1
          %s131 = smul.addr %s130, 8
          %s132 = scalar_lea.vmem [#allocation5], %s131
          %s133 = sld [smem:[#allocation3 + %s26]]
          %s134 = smul.u32 4, %s133
          %s136 = ssub.s32 128, 128
          %137 = vsyncadd %s129, %s136
          %s138 = smul.addr %s134, 32
          %s139 = scalar_lea.hbm %s2, %s138
          %s141 = sshll.u32 %s132, 4
          %s142 = int_to_ptr.vmem [resolvable:$true] %s141
          %144 = dma.hbm_to_vmem [thread:$0]  %s139, 128, %s142, %s129
        $region24: #{tpu_custom_call.1} parent=19 // pred_fallthru
          _
      $region20: #{tpu_custom_call.1} parent=5 // pred_fallthru
        _
      %p145 = scmp.le.s32.totalorder 1, %s26
      %p146 = scmp.lt.s32.totalorder %s26, 9
      %p147 = pnand %p145, %p146
      %p148 = pneg %p147
      // Predicated region
      $region25: #{tpu_custom_call.1} parent=5 // pred_check
        _
      $region26: #{tpu_custom_call.1} parent=5 // pred_check_branch
        %150 = sbr.rel (%p147) target = $region28
      $region27: #{tpu_custom_call.1} parent=5 // pred_region
        %s151 = ssub.s32 %s26, 1
        %s152 = sand.u32 %s41, 1
        %s153 = scalar_lea.sflag [#allocation6], %s152
        %s154 = sand.u32 %s41, 1
        %s155 = smul.addr %s154, 8
        %s156 = scalar_lea.vmem [#allocation5], %s155
        // Predicated region
        $region29: #{tpu_custom_call.1} parent=27 // pred_check
          %p157 = pneg %p54
        $region30: #{tpu_custom_call.1} parent=27 // pred_check_branch
          %159 = sbr.rel (%p157) target = $region32
        $region31: #{tpu_custom_call.1} parent=27 // pred_region
          %160 = dma.done %s153, 128
        $region32: #{tpu_custom_call.1} parent=27 // pred_fallthru
          _
        %s161 = sand.u32 %s41, 1
        %s162 = scalar_lea.sflag [#allocation6], %s161
        %s163 = sand.u32 %s41, 1
        %s164 = smul.addr %s163, 8
        %s165 = scalar_lea.vmem [#allocation5], %s164
        %p166 = pneg %p54
        %p167 = pneg %p51
        %p168 = pneg %p75
        %p169 = pneg %p72
        %p170 = pneg %p103
        %p171 = pneg %p100
        %s172 = sand.u32 %s90, 1
        %s173 = scalar_lea.sflag [#allocation7], %s172
        %s174 = sand.u32 %s90, 1
        %s175 = smul.addr %s174, 8
        %s176 = scalar_lea.vmem [#allocation8], %s175
        %s177 = sld [smem:[#allocation3 + %s31]]
        %s178 = smul.u32 4, %s177
        %s179 = sld [smem:[#allocation3 + %s31]]
        %s180 = smul.u32 4, %s179
        %s181 = sld [smem:[#allocation3 + %s31]]
        %s182 = smul.u32 %s181, 512
        %v183 = vlaneseq
        %v184 = vand.u32 %v183, 127
        %v185 = vadd.s32 %v184, 128
        %v186 = vadd.s32 %v184, 256
        %v187 = vadd.s32 %v184, 384
        %v188 = vstv %s182
        %v189 = vadd.s32 %v188, %v184
        %v190 = vadd.s32 %v188, %v185
        %v191 = vadd.s32 %v188, %v186
        %v192 = vadd.s32 %v188, %v187
        %s193 = sld [smem:[#allocation4]]
        %v194 = vstv %s193
        %vm195 = vcmp.eq.s32.totalorder %v189, %v194
        %vm196 = vcmp.eq.s32.totalorder %v190, %v194
        %vm197 = vcmp.eq.s32.totalorder %v191, %v194
        %vm198 = vcmp.eq.s32.totalorder %v192, %v194
        %s199 = sld [smem:[#allocation4 + $0x1]]
        %v200 = vstv %s199
        %vm201 = vcmp.eq.s32.totalorder %v189, %v200
        %vm202 = vcmp.eq.s32.totalorder %v190, %v200
        %vm203 = vcmp.eq.s32.totalorder %v191, %v200
        %vm204 = vcmp.eq.s32.totalorder %v192, %v200
        %vm205 = vmor %vm195, %vm201
        %vm206 = vmor %vm196, %vm202
        %vm207 = vmor %vm197, %vm203
        %vm208 = vmor %vm198, %vm204
        %s209 = sld [smem:[#allocation4 + $0x2]]
        %v210 = vstv %s209
        %vm211 = vcmp.eq.s32.totalorder %v189, %v210
        %vm212 = vcmp.eq.s32.totalorder %v190, %v210
        %vm213 = vcmp.eq.s32.totalorder %v191, %v210
        %vm214 = vcmp.eq.s32.totalorder %v192, %v210
        %vm215 = vmor %vm205, %vm211
        %vm216 = vmor %vm206, %vm212
        %vm217 = vmor %vm207, %vm213
        %vm218 = vmor %vm208, %vm214
        %s219 = sld [smem:[#allocation4 + $0x3]]
        %v220 = vstv %s219
        %vm221 = vcmp.eq.s32.totalorder %v189, %v220
        %vm222 = vcmp.eq.s32.totalorder %v190, %v220
        %vm223 = vcmp.eq.s32.totalorder %v191, %v220
        %vm224 = vcmp.eq.s32.totalorder %v192, %v220
        %vm225 = vmor %vm215, %vm221
        %vm226 = vmor %vm216, %vm222
        %vm227 = vmor %vm217, %vm223
        %vm228 = vmor %vm218, %vm224
        %s229 = sld [smem:[#allocation4 + $0x4]]
        %v230 = vstv %s229
        %vm231 = vcmp.eq.s32.totalorder %v189, %v230
        %vm232 = vcmp.eq.s32.totalorder %v190, %v230
        %vm233 = vcmp.eq.s32.totalorder %v191, %v230
        %vm234 = vcmp.eq.s32.totalorder %v192, %v230
        %vm235 = vmor %vm225, %vm231
        %vm236 = vmor %vm226, %vm232
        %vm237 = vmor %vm227, %vm233
        %vm238 = vmor %vm228, %vm234
        %s239 = sld [smem:[#allocation4 + $0x5]]
        %v240 = vstv %s239
        %vm241 = vcmp.eq.s32.totalorder %v189, %v240
        %vm242 = vcmp.eq.s32.totalorder %v190, %v240
        %vm243 = vcmp.eq.s32.totalorder %v191, %v240
        %vm244 = vcmp.eq.s32.totalorder %v192, %v240
        %vm245 = vmor %vm235, %vm241
        %vm246 = vmor %vm236, %vm242
        %vm247 = vmor %vm237, %vm243
        %vm248 = vmor %vm238, %vm244
        %s249 = sld [smem:[#allocation4 + $0x6]]
        %v250 = vstv %s249
        %vm251 = vcmp.eq.s32.totalorder %v189, %v250
        %vm252 = vcmp.eq.s32.totalorder %v190, %v250
        %vm253 = vcmp.eq.s32.totalorder %v191, %v250
        %vm254 = vcmp.eq.s32.totalorder %v192, %v250
        %vm255 = vmor %vm245, %vm251
        %vm256 = vmor %vm246, %vm252
        %vm257 = vmor %vm247, %vm253
        %vm258 = vmor %vm248, %vm254
        %s259 = sld [smem:[#allocation4 + $0x7]]
        %v260 = vstv %s259
        %vm261 = vcmp.eq.s32.totalorder %v189, %v260
        %vm262 = vcmp.eq.s32.totalorder %v190, %v260
        %vm263 = vcmp.eq.s32.totalorder %v191, %v260
        %vm264 = vcmp.eq.s32.totalorder %v192, %v260
        %vm265 = vmor %vm255, %vm261
        %vm266 = vmor %vm256, %vm262
        %vm267 = vmor %vm257, %vm263
        %vm268 = vmor %vm258, %vm264
        %v269 = vld [vmem:[%s156] sm:$0xff]
        %v270 = vld [vmem:[%s3] sm:$0x3]
        %272 = vset.pattern.permute.xlu0 0
        %273 = vperm.xlu0 %272, %v270
        %v274 = vpop.permute.xlu0 %273
        %v276 = vunpack.c.l.s4 269488144
        %v277 = vunpack.c.0.s8 %v276
        %v278 = vlaneseq
        %v279 = vshrl.u32 %v278, 7
        %v280 = vsub.s32 %v277, %v279
        %v281 = vrot.slane %v274, %v280
        %v283 = vmul.f32 %v269, %v281
        %v284 = vsel %vm265, 1, 0
        %v285 = vsel %vm266, 1, 0
        %v286 = vsel %vm267, 1, 0
        %v287 = vsel %vm268, 1, 0
        %vm288 = vcmp.eq.s32.totalorder %v284, 1
        %vm289 = vcmp.eq.s32.totalorder %v285, 1
        %vm290 = vcmp.eq.s32.totalorder %v286, 1
        %vm291 = vcmp.eq.s32.totalorder %v287, 1
        %v293 = vcombine.high %v283, %v283
        %v295 = vunpack.c.l.s4 1983009808
        %v296 = vunpack.c.0.s8 %v295
        %v297 = vlaneseq
        %v298 = vshrl.u32 %v297, 7
        %v299 = vsub.s32 %v296, %v298
        %v300 = vrot.slane %v283, %v299
        %v302 = vunpack.c.l.s4 1983009808
        %v303 = vunpack.c.0.s8 %v302
        %v304 = vlaneseq
        %v305 = vshrl.u32 %v304, 7
        %v306 = vsub.s32 %v303, %v305
        %v307 = vrot.slane %v293, %v306
        %v308 = vcombine.high %v300, %v300
        %v309 = vcombine.high %v307, %v307
        %v315 = vcombine.high %v269, %v269
        %v317 = vunpack.c.l.s4 1983009808
        %v318 = vunpack.c.0.s8 %v317
        %v319 = vlaneseq
        %v320 = vshrl.u32 %v319, 7
        %v321 = vsub.s32 %v318, %v320
        %v322 = vrot.slane %v269, %v321
        %v324 = vunpack.c.l.s4 1983009808
        %v325 = vunpack.c.0.s8 %v324
        %v326 = vlaneseq
        %v327 = vshrl.u32 %v326, 7
        %v328 = vsub.s32 %v325, %v327
        %v329 = vrot.slane %v315, %v328
        %v330 = vcombine.high %v322, %v322
        %v331 = vcombine.high %v329, %v329
        %v336 = vsel %vm288, %v300, %v322
        %v337 = vsel %vm289, %v308, %v330
        %v338 = vsel %vm290, %v307, %v329
        %v339 = vsel %vm291, %v309, %v331
        %v344 = vcombine.low %v336, %v337
        %v345 = vcombine.low %v338, %v339
        %v347 = vunpack.c.l.s4 1983009808
        %v348 = vunpack.c.0.s8 %v347
        %v349 = vlaneseq
        %v350 = vshrl.u32 %v349, 7
        %v351 = vsub.s32 %v348, %v350
        %v352 = vrot.slane %v344, %v351
        %v354 = vunpack.c.l.s4 1983009808
        %v355 = vunpack.c.0.s8 %v354
        %v356 = vlaneseq
        %v357 = vshrl.u32 %v356, 7
        %v358 = vsub.s32 %v355, %v357
        %v359 = vrot.slane %v345, %v358
        %v360 = vcombine.low %v352, %v359
        %362 = vst [vmem:[%s176] sm:$0xff] %v360
        %s363 = sand.u32 %s90, 1
        %s364 = scalar_lea.sflag [#allocation7], %s363
        %s365 = sand.u32 %s90, 1
        %s366 = smul.addr %s365, 8
        %s367 = scalar_lea.vmem [#allocation8], %s366
        // Predicated region
        $region33: #{tpu_custom_call.1} parent=27 // pred_check
          %p368 = pneg %p100
        $region34: #{tpu_custom_call.1} parent=27 // pred_check_branch
          %370 = sbr.rel (%p368) target = $region36
        $region35: #{tpu_custom_call.1} parent=27 // pred_region
          %s371 = sld [smem:[#allocation3 + %s31]]
          %s372 = smul.u32 4, %s371
          %s374 = ssub.s32 128, 128
          %375 = vsyncadd %s364, %s374
          %s376 = smul.addr %s372, 32
          %s377 = scalar_lea.hbm %s4, %s376
          %s379 = sshll.u32 %s367, 4
          %s380 = int_to_ptr.vmem [resolvable:$true] %s379
          %382 = dma.vmem_to_hbm [thread:$0]  %s380, 128, %s377, %s364
        $region36: #{tpu_custom_call.1} parent=27 // pred_fallthru
          _
      $region28: #{tpu_custom_call.1} parent=5 // pred_fallthru
        _
      %p383 = scmp.le.s32.totalorder 2, %s26
      // Predicated region
      $region37: #{tpu_custom_call.1} parent=5 // pred_check
        %p384 = pneg %p383
      $region38: #{tpu_custom_call.1} parent=5 // pred_check_branch
        %386 = sbr.rel (%p384) target = $region40
      $region39: #{tpu_custom_call.1} parent=5 // pred_region
        %s387 = ssub.s32 %s26, 2
        // Predicated region
        $region41: #{tpu_custom_call.1} parent=39 // pred_check
          %p388 = pneg %p106
        $region42: #{tpu_custom_call.1} parent=39 // pred_check_branch
          %390 = sbr.rel (%p388) target = $region44
        $region43: #{tpu_custom_call.1} parent=39 // pred_region
          %s391 = sand.u32 %s91, 1
          %s392 = scalar_lea.sflag [#allocation7], %s391
          %s393 = sand.u32 %s91, 1
          %s394 = smul.addr %s393, 8
          %s395 = scalar_lea.vmem [#allocation8], %s394
          %396 = dma.done %s392, 128
        $region44: #{tpu_custom_call.1} parent=39 // pred_fallthru
          _
      $region40: #{tpu_custom_call.1} parent=5 // pred_fallthru
        _
    $region6: #{tpu_custom_call.1} parent=1 // loop_footer
      %s30 = sadd.s32 1, %s26
    $region7: #{tpu_custom_call.1} parent=1 // loop_footer_branch
      %25 = sbr.rel target = $region3
    $region8: #{tpu_custom_call.1} parent=1 // loop_exit
      _
    %397 = vsyncpa [#allocation6], 1
    %s398 = scalar_lea.sflag [#allocation6], 1
    %399 = vsyncpa %s398, 1
    %400 = vsyncpa [#allocation7], 1
    %s401 = scalar_lea.sflag [#allocation7], 1
    %402 = vsyncpa %s401, 1

</llo_original>
